<compile_context>
chip_gen: v7x
topology: tpu7x:2x2x1
jax: 0.10.0
libtpu: 0.0.40
codegen_flags: <defaults>
</compile_context>

<pallas_src>
import jax
import jax.numpy as jnp
from jax import lax
from jax.experimental import pallas as pl
from jax.experimental.pallas import tpu as pltpu

INPUT_DIM = 128
HIDDEN_DIMS = [64, 32]
LATENT_DIM = 16
BN_EPS = 1e-5

# (din, dout) of the six Linears, forward order.
_LAYER_DIMS = ((128, 64), (64, 32), (32, 16), (16, 32), (32, 64), (64, 128))
_W_DINS = tuple(d for d, _ in _LAYER_DIMS)
_W_OFFS = tuple(int(sum(_W_DINS[:i])) for i in range(len(_W_DINS)))  # 0,128,192,224,240,272
_W_ROWS = int(sum(_W_DINS))   # 336 rows == 21 bf16 (16,128) sublane tiles

# Vector-slab row indices.
_B3, _B6 = 0, 1                                      # latent bias, output bias
_G1, _BT1, _G2, _BT2, _G3, _BT3, _G4, _BT4 = 2, 3, 4, 5, 6, 7, 8, 9
_NUM_VEC = 10


def autoencoder_kernel(x_ref, w_ref, v_ref, out_ref):
    """One full forward pass for one BN mini-batch (one grid step).

    x_ref:   (1, B, 128)      activations, features on the lane axis
    w_ref:   (336, 128) bf16  compact weight slab (contraction axis stacked)
    v_ref:   (10, 128)  f32   b3, b6, gamma/beta x4 (zero-padded lanes)
    out_ref: (1, B, 128)
    """
    x = x_ref[0]
    inv_n = 1.0 / x.shape[0]

    def linear(h, layer):
        # Pre-BN biases are dropped: batch-mean subtraction cancels any
        # constant row offset exactly (numerics unchanged).
        din = _W_DINS[layer]
        off = _W_OFFS[layer]
        w = w_ref[pl.ds(off, din), :]                       # (din, 128) bf16, tile-aligned
        return jnp.dot(h[:, :din].astype(jnp.bfloat16), w,
                       preferred_element_type=jnp.float32)  # bf16 MXU, f32 acc

    def bn_relu(h, g_row, b_row):
        # Training-mode BatchNorm1d (batch mean, biased variance) fused into a
        # per-feature scale/shift: y = h*a + c,
        #   a = gamma * rsqrt(var + eps),  c = beta - mean * a.
        s = jnp.sum(h, axis=0, keepdims=True)
        ss = jnp.sum(h * h, axis=0, keepdims=True)
        mean = s * inv_n
        var = jnp.maximum(ss * inv_n - mean * mean, 0.0)     # clamp cancellation
        a = lax.rsqrt(var + BN_EPS) * v_ref[g_row]           # rsqrt on EUP slot
        c = v_ref[b_row] - mean * a
        return jnp.maximum(h * a + c, 0.0)

    # ---- encoder ----
    h = bn_relu(linear(x, 0), _G1, _BT1)                     # 128 -> 64
    h = bn_relu(linear(h, 1), _G2, _BT2)                     # 64  -> 32
    z = linear(h, 2) + v_ref[_B3]                            # 32  -> 16 latent

    # ---- decoder ----
    h = bn_relu(linear(z, 3), _G3, _BT3)                     # 16  -> 32
    h = bn_relu(linear(h, 4), _G4, _BT4)                     # 32  -> 64
    y = linear(h, 5) + v_ref[_B6]                            # 64  -> 128, no act.

    out_ref[0] = y.astype(out_ref.dtype)


def init_params(key):
    """Deterministic PyTorch-style init. Linear weights stored as (in, out)."""
    dims = [INPUT_DIM] + HIDDEN_DIMS + [LATENT_DIM]
    dec_dims = [LATENT_DIM] + list(reversed(HIDDEN_DIMS)) + [INPUT_DIM]

    params = {}
    keys = jax.random.split(key, 12)
    k = iter(keys)

    def lin(name, din, dout):
        bound = 1.0 / jnp.sqrt(din)
        params[f"{name}_w"] = jax.random.uniform(
            next(k), (din, dout), jnp.float32, -bound, bound)
        params[f"{name}_b"] = jax.random.uniform(
            next(k), (1, dout), jnp.float32, -bound, bound)

    def bn(name, d):
        params[f"{name}_g"] = jnp.ones((1, d), jnp.float32)
        params[f"{name}_beta"] = jnp.zeros((1, d), jnp.float32)

    lin("enc1", dims[0], dims[1]); bn("bn1", dims[1])
    lin("enc2", dims[1], dims[2]); bn("bn2", dims[2])
    lin("enc3", dims[2], dims[3])
    lin("dec1", dec_dims[0], dec_dims[1]); bn("bn3", dec_dims[1])
    lin("dec2", dec_dims[1], dec_dims[2]); bn("bn4", dec_dims[2])
    lin("dec3", dec_dims[2], dec_dims[3])
    return params


def pack_params(params):
    """Pack parameters into two contiguous slabs (done once, outside the step).

    w_slab: (336, 128) bf16 — Linears concatenated along the contraction axis,
            each dout zero-padded to 128 lanes.
    v_slab: (10, 128)  f32  — b3, b6, gamma/beta x4, zero-padded lanes.
            IMPORTANT: padded gamma/beta lanes must be EXACTLY 0 (never 1!);
            padded columns stay identically zero through bn_relu only because
            a = rsqrt(var+eps) * gamma_pad = 0 there.
    """
    D = INPUT_DIM

    def pad_w(w):
        return jnp.pad(w, ((0, 0), (0, D - w.shape[1])))     # pad dout -> 128 lanes

    w_slab = jnp.concatenate([
        pad_w(params["enc1_w"]), pad_w(params["enc2_w"]), pad_w(params["enc3_w"]),
        pad_w(params["dec1_w"]), pad_w(params["dec2_w"]), pad_w(params["dec3_w"]),
    ], axis=0).astype(jnp.bfloat16)                           # (336, 128) bf16
    assert w_slab.shape == (_W_ROWS, D)

    def pad_v(v):
        v = v.reshape(-1)
        return jnp.pad(v, (0, D - v.shape[0]))                # zero pads

    v_slab = jnp.stack([
        pad_v(params["enc3_b"]), pad_v(params["dec3_b"]),
        pad_v(params["bn1_g"]), pad_v(params["bn1_beta"]),
        pad_v(params["bn2_g"]), pad_v(params["bn2_beta"]),
        pad_v(params["bn3_g"]), pad_v(params["bn3_beta"]),
        pad_v(params["bn4_g"]), pad_v(params["bn4_beta"]),
    ])                                                        # (10, 128) f32
    return w_slab, v_slab


def batchnorm_autoencoder(x, w_slab, v_slab):
    """x: (G, B, 128) — G independent BN mini-batches — or a single (B, 128)."""
    squeeze = (x.ndim == 2)
    if squeeze:
        x = x[None]
    G, B, D = x.shape
    assert D == INPUT_DIM

    flops_per_group = 2 * B * sum(din * dout for din, dout in _LAYER_DIMS)
    bytes_accessed = (4 * (x.size + x.size + v_slab.size) + 2 * w_slab.size)

    out = pl.pallas_call(
        autoencoder_kernel,
        out_shape=jax.ShapeDtypeStruct((G, B, D), jnp.float32),
        grid=(G,),
        in_specs=[
            pl.BlockSpec((1, B, D), lambda g: (g, 0, 0)),          # x: per-group tile
            pl.BlockSpec((_W_ROWS, D), lambda g: (0, 0)),          # weights: resident
            pl.BlockSpec((_NUM_VEC, D), lambda g: (0, 0)),         # vectors: resident
        ],
        out_specs=pl.BlockSpec((1, B, D), lambda g: (g, 0, 0)),
        compiler_params=pltpu.CompilerParams(
            dimension_semantics=("parallel",)),                    # v7x: 2 TCs; no-op elsewhere
        cost_estimate=pl.CostEstimate(
            flops=G * flops_per_group,
            transcendentals=G * 4 * INPUT_DIM,                     # 4 rsqrt vectors / group
            bytes_accessed=bytes_accessed),
    )(x, w_slab, v_slab)
    return out[0] if squeeze else out


def _reference(x, p, quantize=False):
    """Pure-JAX reference for one BN mini-batch, replicating the PyTorch
    training-mode forward (pre-BN biases, centered biased variance).
    quantize=True mimics the kernel's bf16 weight/activation rounding."""
    def q(a):
        return a.astype(jnp.bfloat16).astype(jnp.float32) if quantize else a

    def mm(h, w):
        return q(h) @ q(w)

    def bn(h, g, b):
        m = jnp.mean(h, axis=0, keepdims=True)
        v = jnp.mean((h - m) ** 2, axis=0, keepdims=True)
        return (h - m) / jnp.sqrt(v + BN_EPS) * g + b

    h = mm(x, p["enc1_w"]) + p["enc1_b"]
    h = jnp.maximum(bn(h, p["bn1_g"], p["bn1_beta"]), 0.0)
    h = mm(h, p["enc2_w"]) + p["enc2_b"]
    h = jnp.maximum(bn(h, p["bn2_g"], p["bn2_beta"]), 0.0)
    z = mm(h, p["enc3_w"]) + p["enc3_b"]
    h = mm(z, p["dec1_w"]) + p["dec1_b"]
    h = jnp.maximum(bn(h, p["bn3_g"], p["bn3_beta"]), 0.0)
    h = mm(h, p["dec2_w"]) + p["dec2_b"]
    h = jnp.maximum(bn(h, p["bn4_g"], p["bn4_beta"]), 0.0)
    return mm(h, p["dec3_w"]) + p["dec3_b"]


if __name__ == "__main__":
    key = jax.random.PRNGKey(0)
    k_param, k_x = jax.random.split(key)

    num_groups, batch = 4, 8                       # 4 independent BN mini-batches of 8
    x = jax.random.normal(k_x, (num_groups, batch, INPUT_DIM), jnp.float32)
    params = init_params(k_param)
    w_slab, v_slab = pack_params(params)

    out = jax.block_until_ready(batchnorm_autoencoder(x, w_slab, v_slab))
    assert out.shape == (num_groups, batch, INPUT_DIM)

    # Check 1: kernel math vs a reference with the same bf16 weight/activation
    # rounding (tight tolerance).
    ref_q = jax.vmap(lambda xb: _reference(xb, params, quantize=True))(x)
    assert jnp.allclose(out, ref_q, atol=1e-2, rtol=1e-2), "mismatch vs bf16 reference"

    # Check 2: closeness to the original full-f32 PyTorch semantics (bf16
    # weights are an intentional approximation, so looser tolerance).
    ref_f32 = jax.vmap(lambda xb: _reference(xb, params, quantize=False))(x)
    assert jnp.allclose(out, ref_f32, atol=1e-1, rtol=1e-1), "mismatch vs f32 reference"

    print("KERNEL_OK")
</pallas_src>

<mosaic_0001>
module attributes {stable_mosaic.version = 11 : i64} {
  func.func @autoencoder_kernel(%arg0: i32, %arg1: memref<1x8x128xf32, #tpu.memory_space<vmem>>, %arg2: memref<336x128xbf16, #tpu.memory_space<vmem>>, %arg3: memref<10x128xf32, #tpu.memory_space<vmem>>, %arg4: memref<1x8x128xf32, #tpu.memory_space<vmem>>) attributes {dimension_semantics = [#tpu.dimension_semantics<parallel>], iteration_bounds = array<i64: 4>, scalar_prefetch = 0 : i64, scratch_operands = 0 : i64, tpu.core_type = #tpu.core_type<tc>, window_params = [{transform_indices = @transform_0, window_bounds = array<i64: 1, 8, 128>}, {pipeline_mode = #tpu.pipeline_mode<synchronous>, transform_indices = @transform_1, window_bounds = array<i64: 336, 128>}, {pipeline_mode = #tpu.pipeline_mode<synchronous>, transform_indices = @transform_2, window_bounds = array<i64: 10, 128>}, {transform_indices = @transform_3, window_bounds = array<i64: 1, 8, 128>}]} {
    %c0 = arith.constant 0 : index
    %c0_0 = arith.constant 0 : index
    %c0_1 = arith.constant 0 : index
    %0 = vector.load %arg1[%c0, %c0_0, %c0_1] : memref<1x8x128xf32, #tpu.memory_space<vmem>>, vector<1x8x128xf32>
    %1 = vector.shape_cast %0 : vector<1x8x128xf32> to vector<8x128xf32>
    %c0_2 = arith.constant 0 : index
    %c0_3 = arith.constant 0 : index
    %2 = vector.load %arg2[%c0_2, %c0_3] : memref<336x128xbf16, #tpu.memory_space<vmem>>, vector<128x128xbf16>
    %3 = arith.truncf %1 : vector<8x128xf32> to vector<8x128xbf16>
    %cst = arith.constant dense<0.000000e+00> : vector<8x128xf32>
    %4 = tpu.matmul %3, %2, %cst {dimension_numbers = #tpu.dot_dimension_numbers<[1], [0], [0], [1], [0, 0, 1, 1], [], []>} : vector<8x128xbf16>, vector<128x128xbf16>, vector<8x128xf32> -> vector<8x128xf32>
    %cst_4 = arith.constant dense<0.000000e+00> : vector<128xf32>
    %5 = vector.multi_reduction <add>, %4, %cst_4 [0] : vector<8x128xf32> to vector<128xf32>
    %6 = vector.shape_cast %5 : vector<128xf32> to vector<1x128xf32>
    %7 = arith.mulf %4, %4 : vector<8x128xf32>
    %cst_5 = arith.constant dense<0.000000e+00> : vector<128xf32>
    %8 = vector.multi_reduction <add>, %7, %cst_5 [0] : vector<8x128xf32> to vector<128xf32>
    %9 = vector.shape_cast %8 : vector<128xf32> to vector<1x128xf32>
    %cst_6 = arith.constant 1.250000e-01 : f32
    %10 = vector.broadcast %cst_6 : f32 to vector<1x128xf32>
    %11 = arith.mulf %6, %10 : vector<1x128xf32>
    %cst_7 = arith.constant 1.250000e-01 : f32
    %12 = vector.broadcast %cst_7 : f32 to vector<1x128xf32>
    %13 = arith.mulf %9, %12 : vector<1x128xf32>
    %14 = arith.mulf %11, %11 : vector<1x128xf32>
    %15 = arith.subf %13, %14 : vector<1x128xf32>
    %cst_8 = arith.constant 0.000000e+00 : f32
    %16 = vector.broadcast %cst_8 : f32 to vector<1x128xf32>
    %17 = arith.maximumf %15, %16 : vector<1x128xf32>
    %cst_9 = arith.constant 9.99999974E-6 : f32
    %18 = vector.broadcast %cst_9 : f32 to vector<1x128xf32>
    %19 = arith.addf %17, %18 : vector<1x128xf32>
    %20 = math.rsqrt %19 : vector<1x128xf32>
    %c2 = arith.constant 2 : index
    %c0_10 = arith.constant 0 : index
    %21 = vector.load %arg3[%c2, %c0_10] : memref<10x128xf32, #tpu.memory_space<vmem>>, vector<1x128xf32>
    %22 = vector.shape_cast %21 : vector<1x128xf32> to vector<128xf32>
    %23 = vector.shape_cast %22 : vector<128xf32> to vector<1x128xf32>
    %24 = arith.mulf %20, %23 : vector<1x128xf32>
    %c3 = arith.constant 3 : index
    %c0_11 = arith.constant 0 : index
    %25 = vector.load %arg3[%c3, %c0_11] : memref<10x128xf32, #tpu.memory_space<vmem>>, vector<1x128xf32>
    %26 = vector.shape_cast %25 : vector<1x128xf32> to vector<128xf32>
    %27 = arith.mulf %11, %24 : vector<1x128xf32>
    %28 = vector.shape_cast %26 : vector<128xf32> to vector<1x128xf32>
    %29 = arith.subf %28, %27 : vector<1x128xf32>
    %30 = vector.broadcast %24 : vector<1x128xf32> to vector<8x128xf32>
    %31 = arith.mulf %4, %30 : vector<8x128xf32>
    %32 = vector.broadcast %29 : vector<1x128xf32> to vector<8x128xf32>
    %33 = arith.addf %31, %32 : vector<8x128xf32>
    %cst_12 = arith.constant 0.000000e+00 : f32
    %34 = vector.broadcast %cst_12 : f32 to vector<8x128xf32>
    %35 = arith.maximumf %33, %34 : vector<8x128xf32>
    %c128 = arith.constant 128 : index
    %c0_13 = arith.constant 0 : index
    %36 = vector.load %arg2[%c128, %c0_13] : memref<336x128xbf16, #tpu.memory_space<vmem>>, vector<64x128xbf16>
    %37 = vector.extract_strided_slice %35 {offsets = [0, 0], sizes = [8, 64], strides = [1, 1]} : vector<8x128xf32> to vector<8x64xf32>
    %38 = arith.truncf %37 : vector<8x64xf32> to vector<8x64xbf16>
    %cst_14 = arith.constant dense<0.000000e+00> : vector<8x128xf32>
    %39 = tpu.matmul %38, %36, %cst_14 {dimension_numbers = #tpu.dot_dimension_numbers<[1], [0], [0], [1], [0, 0, 1, 1], [], []>} : vector<8x64xbf16>, vector<64x128xbf16>, vector<8x128xf32> -> vector<8x128xf32>
    %cst_15 = arith.constant dense<0.000000e+00> : vector<128xf32>
    %40 = vector.multi_reduction <add>, %39, %cst_15 [0] : vector<8x128xf32> to vector<128xf32>
    %41 = vector.shape_cast %40 : vector<128xf32> to vector<1x128xf32>
    %42 = arith.mulf %39, %39 : vector<8x128xf32>
    %cst_16 = arith.constant dense<0.000000e+00> : vector<128xf32>
    %43 = vector.multi_reduction <add>, %42, %cst_16 [0] : vector<8x128xf32> to vector<128xf32>
    %44 = vector.shape_cast %43 : vector<128xf32> to vector<1x128xf32>
    %cst_17 = arith.constant 1.250000e-01 : f32
    %45 = vector.broadcast %cst_17 : f32 to vector<1x128xf32>
    %46 = arith.mulf %41, %45 : vector<1x128xf32>
    %cst_18 = arith.constant 1.250000e-01 : f32
    %47 = vector.broadcast %cst_18 : f32 to vector<1x128xf32>
    %48 = arith.mulf %44, %47 : vector<1x128xf32>
    %49 = arith.mulf %46, %46 : vector<1x128xf32>
    %50 = arith.subf %48, %49 : vector<1x128xf32>
    %cst_19 = arith.constant 0.000000e+00 : f32
    %51 = vector.broadcast %cst_19 : f32 to vector<1x128xf32>
    %52 = arith.maximumf %50, %51 : vector<1x128xf32>
    %cst_20 = arith.constant 9.99999974E-6 : f32
    %53 = vector.broadcast %cst_20 : f32 to vector<1x128xf32>
    %54 = arith.addf %52, %53 : vector<1x128xf32>
    %55 = math.rsqrt %54 : vector<1x128xf32>
    %c4 = arith.constant 4 : index
    %c0_21 = arith.constant 0 : index
    %56 = vector.load %arg3[%c4, %c0_21] : memref<10x128xf32, #tpu.memory_space<vmem>>, vector<1x128xf32>
    %57 = vector.shape_cast %56 : vector<1x128xf32> to vector<128xf32>
    %58 = vector.shape_cast %57 : vector<128xf32> to vector<1x128xf32>
    %59 = arith.mulf %55, %58 : vector<1x128xf32>
    %c5 = arith.constant 5 : index
    %c0_22 = arith.constant 0 : index
    %60 = vector.load %arg3[%c5, %c0_22] : memref<10x128xf32, #tpu.memory_space<vmem>>, vector<1x128xf32>
    %61 = vector.shape_cast %60 : vector<1x128xf32> to vector<128xf32>
    %62 = arith.mulf %46, %59 : vector<1x128xf32>
    %63 = vector.shape_cast %61 : vector<128xf32> to vector<1x128xf32>
    %64 = arith.subf %63, %62 : vector<1x128xf32>
    %65 = vector.broadcast %59 : vector<1x128xf32> to vector<8x128xf32>
    %66 = arith.mulf %39, %65 : vector<8x128xf32>
    %67 = vector.broadcast %64 : vector<1x128xf32> to vector<8x128xf32>
    %68 = arith.addf %66, %67 : vector<8x128xf32>
    %cst_23 = arith.constant 0.000000e+00 : f32
    %69 = vector.broadcast %cst_23 : f32 to vector<8x128xf32>
    %70 = arith.maximumf %68, %69 : vector<8x128xf32>
    %c192 = arith.constant 192 : index
    %c0_24 = arith.constant 0 : index
    %71 = vector.load %arg2[%c192, %c0_24] : memref<336x128xbf16, #tpu.memory_space<vmem>>, vector<32x128xbf16>
    %72 = vector.extract_strided_slice %70 {offsets = [0, 0], sizes = [8, 32], strides = [1, 1]} : vector<8x128xf32> to vector<8x32xf32>
    %73 = arith.truncf %72 : vector<8x32xf32> to vector<8x32xbf16>
    %cst_25 = arith.constant dense<0.000000e+00> : vector<8x128xf32>
    %74 = tpu.matmul %73, %71, %cst_25 {dimension_numbers = #tpu.dot_dimension_numbers<[1], [0], [0], [1], [0, 0, 1, 1], [], []>} : vector<8x32xbf16>, vector<32x128xbf16>, vector<8x128xf32> -> vector<8x128xf32>
    %c0_26 = arith.constant 0 : index
    %c0_27 = arith.constant 0 : index
    %75 = vector.load %arg3[%c0_26, %c0_27] : memref<10x128xf32, #tpu.memory_space<vmem>>, vector<1x128xf32>
    %76 = vector.shape_cast %75 : vector<1x128xf32> to vector<128xf32>
    %77 = vector.shape_cast %76 : vector<128xf32> to vector<1x128xf32>
    %78 = vector.broadcast %77 : vector<1x128xf32> to vector<8x128xf32>
    %79 = arith.addf %74, %78 : vector<8x128xf32>
    %c224 = arith.constant 224 : index
    %c0_28 = arith.constant 0 : index
    %80 = vector.load %arg2[%c224, %c0_28] : memref<336x128xbf16, #tpu.memory_space<vmem>>, vector<16x128xbf16>
    %81 = vector.extract_strided_slice %79 {offsets = [0, 0], sizes = [8, 16], strides = [1, 1]} : vector<8x128xf32> to vector<8x16xf32>
    %82 = arith.truncf %81 : vector<8x16xf32> to vector<8x16xbf16>
    %cst_29 = arith.constant dense<0.000000e+00> : vector<8x128xf32>
    %83 = tpu.matmul %82, %80, %cst_29 {dimension_numbers = #tpu.dot_dimension_numbers<[1], [0], [0], [1], [0, 0, 1, 1], [], []>} : vector<8x16xbf16>, vector<16x128xbf16>, vector<8x128xf32> -> vector<8x128xf32>
    %cst_30 = arith.constant dense<0.000000e+00> : vector<128xf32>
    %84 = vector.multi_reduction <add>, %83, %cst_30 [0] : vector<8x128xf32> to vector<128xf32>
    %85 = vector.shape_cast %84 : vector<128xf32> to vector<1x128xf32>
    %86 = arith.mulf %83, %83 : vector<8x128xf32>
    %cst_31 = arith.constant dense<0.000000e+00> : vector<128xf32>
    %87 = vector.multi_reduction <add>, %86, %cst_31 [0] : vector<8x128xf32> to vector<128xf32>
    %88 = vector.shape_cast %87 : vector<128xf32> to vector<1x128xf32>
    %cst_32 = arith.constant 1.250000e-01 : f32
    %89 = vector.broadcast %cst_32 : f32 to vector<1x128xf32>
    %90 = arith.mulf %85, %89 : vector<1x128xf32>
    %cst_33 = arith.constant 1.250000e-01 : f32
    %91 = vector.broadcast %cst_33 : f32 to vector<1x128xf32>
    %92 = arith.mulf %88, %91 : vector<1x128xf32>
    %93 = arith.mulf %90, %90 : vector<1x128xf32>
    %94 = arith.subf %92, %93 : vector<1x128xf32>
    %cst_34 = arith.constant 0.000000e+00 : f32
    %95 = vector.broadcast %cst_34 : f32 to vector<1x128xf32>
    %96 = arith.maximumf %94, %95 : vector<1x128xf32>
    %cst_35 = arith.constant 9.99999974E-6 : f32
    %97 = vector.broadcast %cst_35 : f32 to vector<1x128xf32>
    %98 = arith.addf %96, %97 : vector<1x128xf32>
    %99 = math.rsqrt %98 : vector<1x128xf32>
    %c6 = arith.constant 6 : index
    %c0_36 = arith.constant 0 : index
    %100 = vector.load %arg3[%c6, %c0_36] : memref<10x128xf32, #tpu.memory_space<vmem>>, vector<1x128xf32>
    %101 = vector.shape_cast %100 : vector<1x128xf32> to vector<128xf32>
    %102 = vector.shape_cast %101 : vector<128xf32> to vector<1x128xf32>
    %103 = arith.mulf %99, %102 : vector<1x128xf32>
    %c7 = arith.constant 7 : index
    %c0_37 = arith.constant 0 : index
    %104 = vector.load %arg3[%c7, %c0_37] : memref<10x128xf32, #tpu.memory_space<vmem>>, vector<1x128xf32>
    %105 = vector.shape_cast %104 : vector<1x128xf32> to vector<128xf32>
    %106 = arith.mulf %90, %103 : vector<1x128xf32>
    %107 = vector.shape_cast %105 : vector<128xf32> to vector<1x128xf32>
    %108 = arith.subf %107, %106 : vector<1x128xf32>
    %109 = vector.broadcast %103 : vector<1x128xf32> to vector<8x128xf32>
    %110 = arith.mulf %83, %109 : vector<8x128xf32>
    %111 = vector.broadcast %108 : vector<1x128xf32> to vector<8x128xf32>
    %112 = arith.addf %110, %111 : vector<8x128xf32>
    %cst_38 = arith.constant 0.000000e+00 : f32
    %113 = vector.broadcast %cst_38 : f32 to vector<8x128xf32>
    %114 = arith.maximumf %112, %113 : vector<8x128xf32>
    %c240 = arith.constant 240 : index
    %c0_39 = arith.constant 0 : index
    %115 = vector.load %arg2[%c240, %c0_39] : memref<336x128xbf16, #tpu.memory_space<vmem>>, vector<32x128xbf16>
    %116 = vector.extract_strided_slice %114 {offsets = [0, 0], sizes = [8, 32], strides = [1, 1]} : vector<8x128xf32> to vector<8x32xf32>
    %117 = arith.truncf %116 : vector<8x32xf32> to vector<8x32xbf16>
    %cst_40 = arith.constant dense<0.000000e+00> : vector<8x128xf32>
    %118 = tpu.matmul %117, %115, %cst_40 {dimension_numbers = #tpu.dot_dimension_numbers<[1], [0], [0], [1], [0, 0, 1, 1], [], []>} : vector<8x32xbf16>, vector<32x128xbf16>, vector<8x128xf32> -> vector<8x128xf32>
    %cst_41 = arith.constant dense<0.000000e+00> : vector<128xf32>
    %119 = vector.multi_reduction <add>, %118, %cst_41 [0] : vector<8x128xf32> to vector<128xf32>
    %120 = vector.shape_cast %119 : vector<128xf32> to vector<1x128xf32>
    %121 = arith.mulf %118, %118 : vector<8x128xf32>
    %cst_42 = arith.constant dense<0.000000e+00> : vector<128xf32>
    %122 = vector.multi_reduction <add>, %121, %cst_42 [0] : vector<8x128xf32> to vector<128xf32>
    %123 = vector.shape_cast %122 : vector<128xf32> to vector<1x128xf32>
    %cst_43 = arith.constant 1.250000e-01 : f32
    %124 = vector.broadcast %cst_43 : f32 to vector<1x128xf32>
    %125 = arith.mulf %120, %124 : vector<1x128xf32>
    %cst_44 = arith.constant 1.250000e-01 : f32
    %126 = vector.broadcast %cst_44 : f32 to vector<1x128xf32>
    %127 = arith.mulf %123, %126 : vector<1x128xf32>
    %128 = arith.mulf %125, %125 : vector<1x128xf32>
    %129 = arith.subf %127, %128 : vector<1x128xf32>
    %cst_45 = arith.constant 0.000000e+00 : f32
    %130 = vector.broadcast %cst_45 : f32 to vector<1x128xf32>
    %131 = arith.maximumf %129, %130 : vector<1x128xf32>
    %cst_46 = arith.constant 9.99999974E-6 : f32
    %132 = vector.broadcast %cst_46 : f32 to vector<1x128xf32>
    %133 = arith.addf %131, %132 : vector<1x128xf32>
    %134 = math.rsqrt %133 : vector<1x128xf32>
    %c8 = arith.constant 8 : index
    %c0_47 = arith.constant 0 : index
    %135 = vector.load %arg3[%c8, %c0_47] : memref<10x128xf32, #tpu.memory_space<vmem>>, vector<1x128xf32>
    %136 = vector.shape_cast %135 : vector<1x128xf32> to vector<128xf32>
    %137 = vector.shape_cast %136 : vector<128xf32> to vector<1x128xf32>
    %138 = arith.mulf %134, %137 : vector<1x128xf32>
    %c9 = arith.constant 9 : index
    %c0_48 = arith.constant 0 : index
    %139 = vector.load %arg3[%c9, %c0_48] : memref<10x128xf32, #tpu.memory_space<vmem>>, vector<1x128xf32>
    %140 = vector.shape_cast %139 : vector<1x128xf32> to vector<128xf32>
    %141 = arith.mulf %125, %138 : vector<1x128xf32>
    %142 = vector.shape_cast %140 : vector<128xf32> to vector<1x128xf32>
    %143 = arith.subf %142, %141 : vector<1x128xf32>
    %144 = vector.broadcast %138 : vector<1x128xf32> to vector<8x128xf32>
    %145 = arith.mulf %118, %144 : vector<8x128xf32>
    %146 = vector.broadcast %143 : vector<1x128xf32> to vector<8x128xf32>
    %147 = arith.addf %145, %146 : vector<8x128xf32>
    %cst_49 = arith.constant 0.000000e+00 : f32
    %148 = vector.broadcast %cst_49 : f32 to vector<8x128xf32>
    %149 = arith.maximumf %147, %148 : vector<8x128xf32>
    %c272 = arith.constant 272 : index
    %c0_50 = arith.constant 0 : index
    %150 = vector.load %arg2[%c272, %c0_50] : memref<336x128xbf16, #tpu.memory_space<vmem>>, vector<64x128xbf16>
    %151 = vector.extract_strided_slice %149 {offsets = [0, 0], sizes = [8, 64], strides = [1, 1]} : vector<8x128xf32> to vector<8x64xf32>
    %152 = arith.truncf %151 : vector<8x64xf32> to vector<8x64xbf16>
    %cst_51 = arith.constant dense<0.000000e+00> : vector<8x128xf32>
    %153 = tpu.matmul %152, %150, %cst_51 {dimension_numbers = #tpu.dot_dimension_numbers<[1], [0], [0], [1], [0, 0, 1, 1], [], []>} : vector<8x64xbf16>, vector<64x128xbf16>, vector<8x128xf32> -> vector<8x128xf32>
    %c1 = arith.constant 1 : index
    %c0_52 = arith.constant 0 : index
    %154 = vector.load %arg3[%c1, %c0_52] : memref<10x128xf32, #tpu.memory_space<vmem>>, vector<1x128xf32>
    %155 = vector.shape_cast %154 : vector<1x128xf32> to vector<128xf32>
    %156 = vector.shape_cast %155 : vector<128xf32> to vector<1x128xf32>
    %157 = vector.broadcast %156 : vector<1x128xf32> to vector<8x128xf32>
    %158 = arith.addf %153, %157 : vector<8x128xf32>
    %c0_53 = arith.constant 0 : index
    %c0_54 = arith.constant 0 : index
    %c0_55 = arith.constant 0 : index
    %159 = vector.load %arg4[%c0_53, %c0_54, %c0_55] : memref<1x8x128xf32, #tpu.memory_space<vmem>>, vector<1x8x128xf32>
    %160 = vector.shape_cast %159 : vector<1x8x128xf32> to vector<8x128xf32>
    %161 = vector.shape_cast %158 : vector<8x128xf32> to vector<1x8x128xf32>
    tpu.vector_store %arg4[%c0_53, %c0_54, %c0_55], %161 {strides = array<i32>} : memref<1x8x128xf32, #tpu.memory_space<vmem>>, vector<1x8x128xf32>,
    return
  }
  func.func @transform_0(%arg0: i32) -> (i32, i32, i32) {
    %c0_i32 = arith.constant 0 : i32
    %c0_i32_0 = arith.constant 0 : i32
    %c0_i32_1 = arith.constant 0 : i32
    return %arg0, %c0_i32, %c0_i32_0 : i32, i32, i32
  }
  func.func @transform_1(%arg0: i32) -> (i32, i32) {
    %c0_i32 = arith.constant 0 : i32
    %c0_i32_0 = arith.constant 0 : i32
    %c0_i32_1 = arith.constant 0 : i32
    return %c0_i32, %c0_i32_0 : i32, i32
  }
  func.func @transform_2(%arg0: i32) -> (i32, i32) {
    %c0_i32 = arith.constant 0 : i32
    %c0_i32_0 = arith.constant 0 : i32
    %c0_i32_1 = arith.constant 0 : i32
    return %c0_i32, %c0_i32_0 : i32, i32
  }
  func.func @transform_3(%arg0: i32) -> (i32, i32, i32) {
    %c0_i32 = arith.constant 0 : i32
    %c0_i32_0 = arith.constant 0 : i32
    %c0_i32_1 = arith.constant 0 : i32
    return %arg0, %c0_i32, %c0_i32_0 : i32, i32, i32
  }
}

</mosaic_0001>

<llo_original>
// kernel: tpu_custom_call.1
$region0: #{tpu_custom_call.1}
  #allocation0 [shape = 'u32[]', space=smem, size = 0x4, offset = 0x4, fixed_abs, tag = 'smem constant byte address 0x4 - core index']
  #allocation1 [shape = 'u32[144,128]{1,0:T(1,128)}', space=vmem, size = 0x12000, scoped, tag = 'internal scratch']
  %s0 = inlined_call_operand.hbm [shape: f32[4,8,128], index: 0, kind: input, shape index: {}]
  %s1 = inlined_call_operand.hbm [shape: bf16[336,128], index: 1, kind: input, shape index: {}]
  %s2 = inlined_call_operand.hbm [shape: f32[10,128], index: 2, kind: input, shape index: {}]
  %s3 = inlined_call_operand.hbm [shape: f32[4,8,128], index: 3, kind: output, shape index: {}]
  %s4 = sld [smem:[#allocation0]]
  $region57: #{tpu_custom_call.1} parent=0
    _
  %s6 = ssub.s32 1, %s4
  %s7 = scalar_select 0, %s6, %s4
  $region1: #{tpu_custom_call.1} parent=0
    #allocation2 [shape = 'u8[8192]{0}', space=vmem, size = 0x2000, scoped, tag = 'input window, operand 0']
    #allocation3 [shape = 's32[2]{0}', space=sflag, size = 0x8, scoped, tag = 'scoped memory for tpu_custom_call.1']
    #allocation4 [shape = 's32[2]{0}', space=sflag, size = 0x8, scoped, tag = 'scoped memory for tpu_custom_call.1']
    #allocation5 [shape = 'u8[86016]{0}', space=vmem, size = 0x15000, scoped, tag = 'input window, operand 1, single buffered']
    #allocation6 [shape = 's32[1]{0}', space=sflag, size = 0x4, scoped, tag = 'scoped memory for tpu_custom_call.1']
    #allocation7 [shape = 'u8[8192]{0}', space=vmem, size = 0x2000, scoped, tag = 'input window, operand 2, single buffered']
    #allocation8 [shape = 'u8[8192]{0}', space=vmem, size = 0x2000, scoped, tag = 'output window, operand 0']
    %8 = vsyncpa [#allocation3], 0
    %s9 = scalar_lea.sflag [#allocation3], 1
    %10 = vsyncpa %s9, 0
    %11 = vsyncpa [#allocation6], 0
    %12 = vsyncpa [#allocation4], 0
    %s13 = scalar_lea.sflag [#allocation4], 1
    %14 = vsyncpa %s13, 0
    loop: start=0, step=1, limit=6
    $region2: #{tpu_custom_call.1} parent=1 // loop_pre_header
      _
    $region3: #{tpu_custom_call.1} parent=1 // loop_header
      %s16 = sphi 0, %s20
      %p17 = scmp.ge.s32.totalorder %s16, 6
      %s26 = sphi 0, %s28
      %s29 = sphi 0, %s26
      %s30 = sphi 0, %s29
      %s46 = sphi 0, %s30
      %s50 = sphi 0, %s50
      %s52 = sphi 0, %s50
      %s53 = sphi 0, %s52
      %s67 = sphi 0, %s53
      %s71 = sphi 0, %s71
      %s73 = sphi 0, %s71
      %s74 = sphi 0, %s73
      %s88 = sphi 0, %s74
      %s94 = sphi 0, %s96
      %s97 = sphi 0, %s94
      %s98 = sphi 0, %s97
      %s114 = sphi 0, %s98
    $region4: #{tpu_custom_call.1} parent=1 // loop_header_branch
      %19 = sbr.rel (%p17) target = $region8
    $region5: #{tpu_custom_call.1} parent=1 // loop_body
      %s21 = ssub.s32 %s16, 1
      %s22 = ssub.s32 %s16, 2
      %s23 = sadd.s32 %s16, 1
      %s24 = ssub.s32 %s16, %s23
      %p25 = scmp.eq.s32.totalorder %s24, 0
      %s27 = sadd.s32 %s26, 1
      %s28 = scalar_select %p25, %s26, %s27
      %p31 = pneg %p25
      %p32 = scmp.eq.s32.totalorder %s16, 3
      %p33 = por %p31, %p32
      %p34 = scmp.ne.s32.totalorder %s26, %s29
      %p35 = scmp.eq.s32.totalorder %s16, 0
      %p36 = por %p34, %p35
      %p37 = scmp.ne.s32.totalorder %s26, %s29
      %p38 = scmp.eq.s32.totalorder %s21, 3
      %p39 = por %p37, %p38
      %p40 = scmp.ne.s32.totalorder %s29, %s30
      %p41 = scmp.eq.s32.totalorder %s21, 0
      %p42 = por %p40, %p41
      %p43 = scmp.ne.s32.totalorder %s29, %s30
      %p44 = scmp.eq.s32.totalorder %s22, 3
      %p45 = por %p43, %p44
      %p47 = scmp.ne.s32.totalorder %s30, %s46
      %p48 = scmp.eq.s32.totalorder %s22, 0
      %p49 = por %p47, %p48
      %s51 = sadd.s32 %s50, 1
      %p54 = scmp.eq.s32.totalorder %s16, 3
      %p55 = scmp.ne.s32.totalorder %s50, %s52
      %p56 = scmp.eq.s32.totalorder %s16, 0
      %p57 = por %p55, %p56
      %p58 = scmp.ne.s32.totalorder %s50, %s52
      %p59 = scmp.eq.s32.totalorder %s21, 3
      %p60 = por %p58, %p59
      %p61 = scmp.ne.s32.totalorder %s52, %s53
      %p62 = scmp.eq.s32.totalorder %s21, 0
      %p63 = por %p61, %p62
      %p64 = scmp.ne.s32.totalorder %s52, %s53
      %p65 = scmp.eq.s32.totalorder %s22, 3
      %p66 = por %p64, %p65
      %p68 = scmp.ne.s32.totalorder %s53, %s67
      %p69 = scmp.eq.s32.totalorder %s22, 0
      %p70 = por %p68, %p69
      %s72 = sadd.s32 %s71, 1
      %p75 = scmp.eq.s32.totalorder %s16, 3
      %p76 = scmp.ne.s32.totalorder %s71, %s73
      %p77 = scmp.eq.s32.totalorder %s16, 0
      %p78 = por %p76, %p77
      %p79 = scmp.ne.s32.totalorder %s71, %s73
      %p80 = scmp.eq.s32.totalorder %s21, 3
      %p81 = por %p79, %p80
      %p82 = scmp.ne.s32.totalorder %s73, %s74
      %p83 = scmp.eq.s32.totalorder %s21, 0
      %p84 = por %p82, %p83
      %p85 = scmp.ne.s32.totalorder %s73, %s74
      %p86 = scmp.eq.s32.totalorder %s22, 3
      %p87 = por %p85, %p86
      %p89 = scmp.ne.s32.totalorder %s74, %s88
      %p90 = scmp.eq.s32.totalorder %s22, 0
      %p91 = por %p89, %p90
      %s92 = ssub.s32 %s16, %s23
      %p93 = scmp.eq.s32.totalorder %s92, 0
      %s95 = sadd.s32 %s94, 1
      %s96 = scalar_select %p93, %s94, %s95
      %p99 = pneg %p93
      %p100 = scmp.eq.s32.totalorder %s16, 3
      %p101 = por %p99, %p100
      %p102 = scmp.ne.s32.totalorder %s94, %s97
      %p103 = scmp.eq.s32.totalorder %s16, 0
      %p104 = por %p102, %p103
      %p105 = scmp.ne.s32.totalorder %s94, %s97
      %p106 = scmp.eq.s32.totalorder %s21, 3
      %p107 = por %p105, %p106
      %p108 = scmp.ne.s32.totalorder %s97, %s98
      %p109 = scmp.eq.s32.totalorder %s21, 0
      %p110 = por %p108, %p109
      %p111 = scmp.ne.s32.totalorder %s97, %s98
      %p112 = scmp.eq.s32.totalorder %s22, 3
      %p113 = por %p111, %p112
      %p115 = scmp.ne.s32.totalorder %s98, %s114
      %p116 = scmp.eq.s32.totalorder %s22, 0
      %p117 = por %p115, %p116
      %p118 = scmp.le.s32.totalorder 1, %s16
      %p119 = scmp.lt.s32.totalorder %s16, 5
      %p120 = pnand %p118, %p119
      %p121 = pneg %p120
      // Predicated region
      $region9: #{tpu_custom_call.1} parent=5 // pred_check
        _
      $region10: #{tpu_custom_call.1} parent=5 // pred_check_branch
        %123 = sbr.rel (%p120) target = $region12
      $region11: #{tpu_custom_call.1} parent=5 // pred_region
        %s124 = ssub.s32 %s16, 1
        // Predicated region
        $region13: #{tpu_custom_call.1} parent=11 // pred_check
          %p125 = pneg %p63
        $region14: #{tpu_custom_call.1} parent=11 // pred_check_branch
          %127 = sbr.rel (%p125) target = $region16
        $region15: #{tpu_custom_call.1} parent=11 // pred_region
          %s129 = ssub.s32 2688, 2688
          %130 = vsyncadd [#allocation6], %s129
          %s131 = sshll.u32 [#allocation5], 4
          %s132 = int_to_ptr.vmem [resolvable:$true] %s131
          %137 = dma.hbm_to_vmem [thread:$0]  %s1, 2688, %s132, [#allocation6], 64, 64, 4
        $region16: #{tpu_custom_call.1} parent=11 // pred_fallthru
          _
        // Predicated region
        $region17: #{tpu_custom_call.1} parent=11 // pred_check
          %p138 = pneg %p84
        $region18: #{tpu_custom_call.1} parent=11 // pred_check_branch
          %140 = sbr.rel (%p138) target = $region20
        $region19: #{tpu_custom_call.1} parent=11 // pred_region
          %s142 = ssub.s32 256, 256
          %143 = vsyncadd [#allocation6], %s142
          %s144 = sshll.u32 [#allocation7], 4
          %s145 = int_to_ptr.vmem [resolvable:$true] %s144
          %150 = dma.hbm_to_vmem [thread:$0]  %s2, 256, %s145, [#allocation6], 128, 128, 8
        $region20: #{tpu_custom_call.1} parent=11 // pred_fallthru
          _
      $region12: #{tpu_custom_call.1} parent=5 // pred_fallthru
        _
      %p151 = scmp.lt.s32.totalorder %s16, 4
      // Predicated region
      $region21: #{tpu_custom_call.1} parent=5 // pred_check
        %p152 = pneg %p151
      $region22: #{tpu_custom_call.1} parent=5 // pred_check_branch
        %154 = sbr.rel (%p152) target = $region24
      $region23: #{tpu_custom_call.1} parent=5 // pred_region
        // Predicated region
        $region25: #{tpu_custom_call.1} parent=23 // pred_check
          %p155 = pneg %p36
        $region26: #{tpu_custom_call.1} parent=23 // pred_check_branch
          %157 = sbr.rel (%p155) target = $region28
        $region27: #{tpu_custom_call.1} parent=23 // pred_region
          %s158 = sand.u32 %s26, 1
          %s159 = scalar_lea.sflag [#allocation3], %s158
          %s160 = sand.u32 %s26, 1
          %s161 = smul.addr %s160, 8
          %s162 = scalar_lea.vmem [#allocation2], %s161
          %s164 = ssub.s32 128, 128
          %165 = vsyncadd %s159, %s164
          %s166 = smul.addr %s16, 128
          %s167 = scalar_lea.hbm %s0, %s166
          %s169 = sshll.u32 %s162, 4
          %s170 = int_to_ptr.vmem [resolvable:$true] %s169
          %172 = dma.hbm_to_vmem [thread:$0]  %s167, 128, %s170, %s159
        $region28: #{tpu_custom_call.1} parent=23 // pred_fallthru
          _
      $region24: #{tpu_custom_call.1} parent=5 // pred_fallthru
        _
      %p173 = scmp.le.s32.totalorder 1, %s16
      %p174 = scmp.lt.s32.totalorder %s16, 5
      %p175 = pnand %p173, %p174
      %p176 = pneg %p175
      // Predicated region
      $region29: #{tpu_custom_call.1} parent=5 // pred_check
        _
      $region30: #{tpu_custom_call.1} parent=5 // pred_check_branch
        %178 = sbr.rel (%p175) target = $region32
      $region31: #{tpu_custom_call.1} parent=5 // pred_region
        %s179 = ssub.s32 %s16, 1
        %s180 = sand.u32 %s29, 1
        %s181 = scalar_lea.sflag [#allocation3], %s180
        %s182 = sand.u32 %s29, 1
        %s183 = smul.addr %s182, 8
        %s184 = scalar_lea.vmem [#allocation2], %s183
        // Predicated region
        $region33: #{tpu_custom_call.1} parent=31 // pred_check
          %p185 = pneg %p42
        $region34: #{tpu_custom_call.1} parent=31 // pred_check_branch
          %187 = sbr.rel (%p185) target = $region36
        $region35: #{tpu_custom_call.1} parent=31 // pred_region
          %188 = dma.done %s181, 128
        $region36: #{tpu_custom_call.1} parent=31 // pred_fallthru
          _
        // Predicated region
        $region37: #{tpu_custom_call.1} parent=31 // pred_check
          %p189 = pneg %p63
        $region38: #{tpu_custom_call.1} parent=31 // pred_check_branch
          %191 = sbr.rel (%p189) target = $region40
        $region39: #{tpu_custom_call.1} parent=31 // pred_region
          %192 = dma.done [#allocation6], 2688
        $region40: #{tpu_custom_call.1} parent=31 // pred_fallthru
          _
        // Predicated region
        $region41: #{tpu_custom_call.1} parent=31 // pred_check
          %p193 = pneg %p84
        $region42: #{tpu_custom_call.1} parent=31 // pred_check_branch
          %195 = sbr.rel (%p193) target = $region44
        $region43: #{tpu_custom_call.1} parent=31 // pred_region
          %196 = dma.done [#allocation6], 256
        $region44: #{tpu_custom_call.1} parent=31 // pred_fallthru
          _
        %s197 = sand.u32 %s29, 1
        %s198 = scalar_lea.sflag [#allocation3], %s197
        %s199 = sand.u32 %s29, 1
        %s200 = smul.addr %s199, 8
        %s201 = scalar_lea.vmem [#allocation2], %s200
        %p202 = pneg %p42
        %p203 = pneg %p39
        %p204 = pneg %p63
        %p205 = pneg %p60
        %p206 = pneg %p84
        %p207 = pneg %p81
        %p208 = pneg %p110
        %p209 = pneg %p107
        %s210 = sand.u32 %s97, 1
        %s211 = scalar_lea.sflag [#allocation4], %s210
        %s212 = sand.u32 %s97, 1
        %s213 = smul.addr %s212, 8
        %s214 = scalar_lea.vmem [#allocation8], %s213
        %v216 = vld [vmem:[%s184] sm:$0xff]
        %v217 = vld [vmem:[#allocation5] sm:$0xf]
        %v218 = vld [vmem:[#allocation5 + $0x4] sm:$0xf]
        %v219 = vld [vmem:[#allocation5 + $0x8] sm:$0xf]
        %v220 = vld [vmem:[#allocation5 + $0xc] sm:$0xf]
        %v221 = vld [vmem:[#allocation5 + $0x10] sm:$0xf]
        %v222 = vld [vmem:[#allocation5 + $0x14] sm:$0xf]
        %v223 = vld [vmem:[#allocation5 + $0x18] sm:$0xf]
        %v224 = vld [vmem:[#allocation5 + $0x1c] sm:$0xf]
        %v225 = vld [vmem:[#allocation5 + $0x20] sm:$0xf]
        %v226 = vld [vmem:[#allocation5 + $0x24] sm:$0xf]
        %v227 = vld [vmem:[#allocation5 + $0x28] sm:$0xf]
        %v228 = vld [vmem:[#allocation5 + $0x2c] sm:$0xf]
        %v229 = vld [vmem:[#allocation5 + $0x30] sm:$0xf]
        %v230 = vld [vmem:[#allocation5 + $0x34] sm:$0xf]
        %v231 = vld [vmem:[#allocation5 + $0x38] sm:$0xf]
        %v232 = vld [vmem:[#allocation5 + $0x3c] sm:$0xf]
        %v233 = vpack.c.bf16 %v216, %v216
        %v250 = vunpack.c.l.b16 %v217
        %v251 = vunpack.c.l.b16 %v218
        %v252 = vunpack.c.l.b16 %v219
        %v253 = vunpack.c.l.b16 %v220
        %v254 = vunpack.c.l.b16 %v221
        %v255 = vunpack.c.l.b16 %v222
        %v256 = vunpack.c.l.b16 %v223
        %v257 = vunpack.c.l.b16 %v224
        %v258 = vunpack.c.l.b16 %v225
        %v259 = vunpack.c.l.b16 %v226
        %v260 = vunpack.c.l.b16 %v227
        %v261 = vunpack.c.l.b16 %v228
        %v262 = vunpack.c.l.b16 %v229
        %v263 = vunpack.c.l.b16 %v230
        %v264 = vunpack.c.l.b16 %v231
        %v265 = vunpack.c.l.b16 %v232
        %v266 = vpack.c.b16 %v251, %v250
        %v267 = vpack.c.b16 %v253, %v252
        %v268 = vpack.c.b16 %v255, %v254
        %v269 = vpack.c.b16 %v257, %v256
        %v270 = vpack.c.b16 %v259, %v258
        %v271 = vpack.c.b16 %v261, %v260
        %v272 = vpack.c.b16 %v263, %v262
        %v273 = vpack.c.b16 %v265, %v264
        %282 = vmatprep.subr.bf16.mxu0 0
        %283 = vmatpush1.bf16.msra.mxu0 %v266
        %284 = vmatprep.subr.bf16.mxu0 0
        %285 = vmatpush1.bf16.msra.mxu0 %v267
        %286 = vmatprep.subr.bf16.mxu0 0
        %287 = vmatpush1.bf16.msra.mxu0 %v268
        %288 = vmatprep.subr.bf16.mxu0 0
        %289 = vmatpush1.bf16.msra.mxu0 %v269
        %290 = vmatprep.subr.bf16.mxu0 0
        %291 = vmatpush1.bf16.msra.mxu0 %v270
        %292 = vmatprep.subr.bf16.mxu0 0
        %293 = vmatpush1.bf16.msra.mxu0 %v271
        %294 = vmatprep.subr.bf16.mxu0 0
        %295 = vmatpush1.bf16.msra.mxu0 %v272
        %296 = vmatprep.subr.bf16.mxu0 0
        %297 = vmatpush1.bf16.msra.mxu0 %v273
        %298 = vmatprep.subr.bf16.mxu0 0
        %299 = vmatpush1.bf16.msra.mxu0 0
        %300 = vmatprep.subr.bf16.mxu0 0
        %301 = vmatpush1.bf16.msra.mxu0 0
        %302 = vmatprep.subr.bf16.mxu0 0
        %303 = vmatpush1.bf16.msra.mxu0 0
        %304 = vmatprep.subr.bf16.mxu0 0
        %305 = vmatpush1.bf16.msra.mxu0 0
        %306 = vmatprep.subr.bf16.mxu0 0
        %307 = vmatpush1.bf16.msra.mxu0 0
        %308 = vmatprep.subr.bf16.mxu0 0
        %309 = vmatpush1.bf16.msra.mxu0 0
        %310 = vmatprep.subr.bf16.mxu0 0
        %311 = vmatpush1.bf16.msra.mxu0 0
        %312 = vmatprep.subr.bf16.mxu0 0
        %313 = vmatpush1.bf16.msra.mxu0 0
        %314 = vmatprep.mubr.bf16.mxu0 0
        %315 = vmatmul.mubr.bf16.gmra.mrb[0].mxu0 %v233
        %v316 = vpop.f32.mrb[0].mxu0
        %v317 = vadd.f32 0.0, %v316
        %v318 = vpop.f32.mrb[0].mxu0
        %v319 = vpop.f32.mrb[0].mxu0
        %v320 = vpop.f32.mrb[0].mxu0
        %321 = vdwg.mxu0
        %v322 = vrot.slane %v317, 4
        %v323 = vadd.f32 %v317, %v322
        %v324 = vrot.slane %v323, 2
        %v325 = vadd.f32 %v323, %v324
        %v326 = vrot.slane %v325, 1
        %v327 = vadd.f32 %v325, %v326
        %v328 = vmul.f32 %v317, %v317
        %v329 = vrot.slane %v328, 4
        %v330 = vadd.f32 %v328, %v329
        %v331 = vrot.slane %v330, 2
        %v332 = vadd.f32 %v330, %v331
        %v333 = vrot.slane %v332, 1
        %v334 = vadd.f32 %v332, %v333
        %v335 = vmul.f32 %v327, 0.125
        %v336 = vmul.f32 %v334, 0.125
        %v337 = vmul.f32 %v335, %v335
        %v338 = vsub.f32 %v336, %v337
        %v339 = vmax.f32 %v338, 0.0
        %v340 = vadd.f32 %v339, 1e-05
        %v341 = vrsqrt.pop %v340
        %v342 = vld [vmem:[#allocation7 + $0x2] sm:$0x1]
        %v343 = vmul.f32 %v341, %v342
        %v344 = vld [vmem:[#allocation7 + $0x3] sm:$0x1]
        %v345 = vmul.f32 %v335, %v343
        %v346 = vsub.f32 %v344, %v345
        %v347 = vlaneseq
        %v348 = vshrl.u32 %v347, 7
        %v349 = vsub.s32 0, %v348
        %v350 = vrot.slane %v343, %v349
        %v351 = vmul.f32 %v317, %v350
        %v352 = vlaneseq
        %v353 = vshrl.u32 %v352, 7
        %v354 = vsub.s32 0, %v353
        %v355 = vrot.slane %v346, %v354
        %v356 = vadd.f32 %v351, %v355
        %v357 = vmax.f32 %v356, 0.0
        %v358 = vld [vmem:[#allocation5 + $0x40] sm:$0xf]
        %v359 = vld [vmem:[#allocation5 + $0x44] sm:$0xf]
        %v360 = vld [vmem:[#allocation5 + $0x48] sm:$0xf]
        %v361 = vld [vmem:[#allocation5 + $0x4c] sm:$0xf]
        %v362 = vld [vmem:[#allocation5 + $0x50] sm:$0xf]
        %v363 = vld [vmem:[#allocation5 + $0x54] sm:$0xf]
        %v364 = vld [vmem:[#allocation5 + $0x58] sm:$0xf]
        %v365 = vld [vmem:[#allocation5 + $0x5c] sm:$0xf]
        %v366 = vpack.c.bf16 %v357, %v357
        %v375 = vunpack.c.l.b16 %v358
        %v376 = vunpack.c.l.b16 %v359
        %v377 = vunpack.c.l.b16 %v360
        %v378 = vunpack.c.l.b16 %v361
        %v379 = vunpack.c.l.b16 %v362
        %v380 = vunpack.c.l.b16 %v363
        %v381 = vunpack.c.l.b16 %v364
        %v382 = vunpack.c.l.b16 %v365
        %v383 = vpack.c.b16 %v376, %v375
        %v384 = vpack.c.b16 %v378, %v377
        %v385 = vpack.c.b16 %v380, %v379
        %v386 = vpack.c.b16 %v382, %v381
        %vm391 = vcmask 523264
        %v393 = vsel %vm391, %v366, 0
        %395 = vmatprep.subr.bf16.mxu0 0
        %396 = vmatpush1.bf16.msra.mxu0 %v383
        %397 = vmatprep.subr.bf16.mxu0 0
        %398 = vmatpush1.bf16.msra.mxu0 %v384
        %399 = vmatprep.subr.bf16.mxu0 0
        %400 = vmatpush1.bf16.msra.mxu0 %v385
        %401 = vmatprep.subr.bf16.mxu0 0
        %402 = vmatpush1.bf16.msra.mxu0 %v386
        %403 = vmatprep.subr.bf16.mxu0 0
        %404 = vmatpush1.bf16.msra.mxu0 0
        %405 = vmatprep.subr.bf16.mxu0 0
        %406 = vmatpush1.bf16.msra.mxu0 0
        %407 = vmatprep.subr.bf16.mxu0 0
        %408 = vmatpush1.bf16.msra.mxu0 0
        %409 = vmatprep.subr.bf16.mxu0 0
        %410 = vmatpush1.bf16.msra.mxu0 0
        %411 = vmatprep.subr.bf16.mxu0 0
        %412 = vmatpush1.bf16.msra.mxu0 0
        %413 = vmatprep.subr.bf16.mxu0 0
        %414 = vmatpush1.bf16.msra.mxu0 0
        %415 = vmatprep.subr.bf16.mxu0 0
        %416 = vmatpush1.bf16.msra.mxu0 0
        %417 = vmatprep.subr.bf16.mxu0 0
        %418 = vmatpush1.bf16.msra.mxu0 0
        %419 = vmatprep.subr.bf16.mxu0 0
        %420 = vmatpush1.bf16.msra.mxu0 0
        %421 = vmatprep.subr.bf16.mxu0 0
        %422 = vmatpush1.bf16.msra.mxu0 0
        %423 = vmatprep.subr.bf16.mxu0 0
        %424 = vmatpush1.bf16.msra.mxu0 0
        %425 = vmatprep.subr.bf16.mxu0 0
        %426 = vmatpush1.bf16.msra.mxu0 0
        %427 = vmatprep.mubr.bf16.mxu0 0
        %428 = vmatmul.mubr.bf16.gmra.mrb[0].mxu0 %v393
        %v429 = vpop.f32.mrb[0].mxu0
        %v430 = vadd.f32 0.0, %v429
        %v431 = vpop.f32.mrb[0].mxu0
        %v432 = vpop.f32.mrb[0].mxu0
        %v433 = vpop.f32.mrb[0].mxu0
        %434 = vdwg.mxu0
        %v435 = vrot.slane %v430, 4
        %v436 = vadd.f32 %v430, %v435
        %v437 = vrot.slane %v436, 2
        %v438 = vadd.f32 %v436, %v437
        %v439 = vrot.slane %v438, 1
        %v440 = vadd.f32 %v438, %v439
        %v441 = vmul.f32 %v430, %v430
        %v442 = vrot.slane %v441, 4
        %v443 = vadd.f32 %v441, %v442
        %v444 = vrot.slane %v443, 2
        %v445 = vadd.f32 %v443, %v444
        %v446 = vrot.slane %v445, 1
        %v447 = vadd.f32 %v445, %v446
        %v448 = vmul.f32 %v440, 0.125
        %v449 = vmul.f32 %v447, 0.125
        %v450 = vmul.f32 %v448, %v448
        %v451 = vsub.f32 %v449, %v450
        %v452 = vmax.f32 %v451, 0.0
        %v453 = vadd.f32 %v452, 1e-05
        %v454 = vrsqrt.pop %v453
        %v455 = vld [vmem:[#allocation7 + $0x4] sm:$0x1]
        %v456 = vmul.f32 %v454, %v455
        %v457 = vld [vmem:[#allocation7 + $0x5] sm:$0x1]
        %v458 = vmul.f32 %v448, %v456
        %v459 = vsub.f32 %v457, %v458
        %v460 = vlaneseq
        %v461 = vshrl.u32 %v460, 7
        %v462 = vsub.s32 0, %v461
        %v463 = vrot.slane %v456, %v462
        %v464 = vmul.f32 %v430, %v463
        %v465 = vlaneseq
        %v466 = vshrl.u32 %v465, 7
        %v467 = vsub.s32 0, %v466
        %v468 = vrot.slane %v459, %v467
        %v469 = vadd.f32 %v464, %v468
        %v470 = vmax.f32 %v469, 0.0
        %v471 = vld [vmem:[#allocation5 + $0x60] sm:$0xf]
        %v472 = vld [vmem:[#allocation5 + $0x64] sm:$0xf]
        %v473 = vld [vmem:[#allocation5 + $0x68] sm:$0xf]
        %v474 = vld [vmem:[#allocation5 + $0x6c] sm:$0xf]
        %v475 = vpack.c.bf16 %v470, %v470
        %v476 = vld [vmem:[#allocation7] sm:$0x1]
        %v477 = vlaneseq
        %v478 = vshrl.u32 %v477, 7
        %v479 = vsub.s32 0, %v478
        %v480 = vrot.slane %v476, %v479
        %v485 = vunpack.c.l.b16 %v471
        %v486 = vunpack.c.l.b16 %v472
        %v487 = vunpack.c.l.b16 %v473
        %v488 = vunpack.c.l.b16 %v474
        %v489 = vpack.c.b16 %v486, %v485
        %v490 = vpack.c.b16 %v488, %v487
        %vm493 = vcmask 261120
        %v495 = vsel %vm493, %v475, 0
        %497 = vmatprep.subr.bf16.mxu0 0
        %498 = vmatpush1.bf16.msra.mxu0 %v489
        %499 = vmatprep.subr.bf16.mxu0 0
        %500 = vmatpush1.bf16.msra.mxu0 %v490
        %501 = vmatprep.subr.bf16.mxu0 0
        %502 = vmatpush1.bf16.msra.mxu0 0
        %503 = vmatprep.subr.bf16.mxu0 0
        %504 = vmatpush1.bf16.msra.mxu0 0
        %505 = vmatprep.subr.bf16.mxu0 0
        %506 = vmatpush1.bf16.msra.mxu0 0
        %507 = vmatprep.subr.bf16.mxu0 0
        %508 = vmatpush1.bf16.msra.mxu0 0
        %509 = vmatprep.subr.bf16.mxu0 0
        %510 = vmatpush1.bf16.msra.mxu0 0
        %511 = vmatprep.subr.bf16.mxu0 0
        %512 = vmatpush1.bf16.msra.mxu0 0
        %513 = vmatprep.subr.bf16.mxu0 0
        %514 = vmatpush1.bf16.msra.mxu0 0
        %515 = vmatprep.subr.bf16.mxu0 0
        %516 = vmatpush1.bf16.msra.mxu0 0
        %517 = vmatprep.subr.bf16.mxu0 0
        %518 = vmatpush1.bf16.msra.mxu0 0
        %519 = vmatprep.subr.bf16.mxu0 0
        %520 = vmatpush1.bf16.msra.mxu0 0
        %521 = vmatprep.subr.bf16.mxu0 0
        %522 = vmatpush1.bf16.msra.mxu0 0
        %523 = vmatprep.subr.bf16.mxu0 0
        %524 = vmatpush1.bf16.msra.mxu0 0
        %525 = vmatprep.subr.bf16.mxu0 0
        %526 = vmatpush1.bf16.msra.mxu0 0
        %527 = vmatprep.subr.bf16.mxu0 0
        %528 = vmatpush1.bf16.msra.mxu0 0
        %529 = vmatprep.mubr.bf16.mxu0 0
        %530 = vmatmul.mubr.bf16.gmra.mrb[0].mxu0 %v495
        %v531 = vpop.f32.mrb[0].mxu0
        %v532 = vadd.f32 %v480, %v531
        %v533 = vpop.f32.mrb[0].mxu0
        %v534 = vpop.f32.mrb[0].mxu0
        %v535 = vpop.f32.mrb[0].mxu0
        %536 = vdwg.mxu0
        %v537 = vld [vmem:[#allocation5 + $0x70] sm:$0xf]
        %v538 = vld [vmem:[#allocation5 + $0x74] sm:$0xf]
        %v539 = vpack.c.bf16 %v532, %v532
        %v542 = vunpack.c.l.b16 %v537
        %v543 = vunpack.c.l.b16 %v538
        %v544 = vpack.c.b16 %v543, %v542
        %vm546 = vcmask 130048
        %v548 = vsel %vm546, %v539, 0
        %550 = vmatprep.subr.bf16.mxu0 0
        %551 = vmatpush1.bf16.msra.mxu0 %v544
        %552 = vmatprep.subr.bf16.mxu0 0
        %553 = vmatpush1.bf16.msra.mxu0 0
        %554 = vmatprep.subr.bf16.mxu0 0
        %555 = vmatpush1.bf16.msra.mxu0 0
        %556 = vmatprep.subr.bf16.mxu0 0
        %557 = vmatpush1.bf16.msra.mxu0 0
        %558 = vmatprep.subr.bf16.mxu0 0
        %559 = vmatpush1.bf16.msra.mxu0 0
        %560 = vmatprep.subr.bf16.mxu0 0
        %561 = vmatpush1.bf16.msra.mxu0 0
        %562 = vmatprep.subr.bf16.mxu0 0
        %563 = vmatpush1.bf16.msra.mxu0 0
        %564 = vmatprep.subr.bf16.mxu0 0
        %565 = vmatpush1.bf16.msra.mxu0 0
        %566 = vmatprep.subr.bf16.mxu0 0
        %567 = vmatpush1.bf16.msra.mxu0 0
        %568 = vmatprep.subr.bf16.mxu0 0
        %569 = vmatpush1.bf16.msra.mxu0 0
        %570 = vmatprep.subr.bf16.mxu0 0
        %571 = vmatpush1.bf16.msra.mxu0 0
        %572 = vmatprep.subr.bf16.mxu0 0
        %573 = vmatpush1.bf16.msra.mxu0 0
        %574 = vmatprep.subr.bf16.mxu0 0
        %575 = vmatpush1.bf16.msra.mxu0 0
        %576 = vmatprep.subr.bf16.mxu0 0
        %577 = vmatpush1.bf16.msra.mxu0 0
        %578 = vmatprep.subr.bf16.mxu0 0
        %579 = vmatpush1.bf16.msra.mxu0 0
        %580 = vmatprep.subr.bf16.mxu0 0
        %581 = vmatpush1.bf16.msra.mxu0 0
        %582 = vmatprep.mubr.bf16.mxu0 0
        %583 = vmatmul.mubr.bf16.gmra.mrb[0].mxu0 %v548
        %v584 = vpop.f32.mrb[0].mxu0
        %v585 = vadd.f32 0.0, %v584
        %v586 = vpop.f32.mrb[0].mxu0
        %v587 = vpop.f32.mrb[0].mxu0
        %v588 = vpop.f32.mrb[0].mxu0
        %589 = vdwg.mxu0
        %v590 = vrot.slane %v585, 4
        %v591 = vadd.f32 %v585, %v590
        %v592 = vrot.slane %v591, 2
        %v593 = vadd.f32 %v591, %v592
        %v594 = vrot.slane %v593, 1
        %v595 = vadd.f32 %v593, %v594
        %v596 = vmul.f32 %v585, %v585
        %v597 = vrot.slane %v596, 4
        %v598 = vadd.f32 %v596, %v597
        %v599 = vrot.slane %v598, 2
        %v600 = vadd.f32 %v598, %v599
        %v601 = vrot.slane %v600, 1
        %v602 = vadd.f32 %v600, %v601
        %v603 = vmul.f32 %v595, 0.125
        %v604 = vmul.f32 %v602, 0.125
        %v605 = vmul.f32 %v603, %v603
        %v606 = vsub.f32 %v604, %v605
        %v607 = vmax.f32 %v606, 0.0
        %v608 = vadd.f32 %v607, 1e-05
        %v609 = vrsqrt.pop %v608
        %v610 = vld [vmem:[#allocation7 + $0x6] sm:$0x1]
        %v611 = vmul.f32 %v609, %v610
        %v612 = vld [vmem:[#allocation7 + $0x7] sm:$0x1]
        %v613 = vmul.f32 %v603, %v611
        %v614 = vsub.f32 %v612, %v613
        %v615 = vlaneseq
        %v616 = vshrl.u32 %v615, 7
        %v617 = vsub.s32 0, %v616
        %v618 = vrot.slane %v611, %v617
        %v619 = vmul.f32 %v585, %v618
        %v620 = vlaneseq
        %v621 = vshrl.u32 %v620, 7
        %v622 = vsub.s32 0, %v621
        %v623 = vrot.slane %v614, %v622
        %v624 = vadd.f32 %v619, %v623
        %v625 = vmax.f32 %v624, 0.0
        %v626 = vld [vmem:[#allocation5 + $0x78] sm:$0xf]
        %v627 = vld [vmem:[#allocation5 + $0x7c] sm:$0xf]
        %v628 = vld [vmem:[#allocation5 + $0x80] sm:$0xf]
        %v629 = vld [vmem:[#allocation5 + $0x84] sm:$0xf]
        %v630 = vpack.c.bf16 %v625, %v625
        %v635 = vunpack.c.l.b16 %v626
        %v636 = vunpack.c.l.b16 %v627
        %v637 = vunpack.c.l.b16 %v628
        %v638 = vunpack.c.l.b16 %v629
        %v639 = vpack.c.b16 %v636, %v635
        %v640 = vpack.c.b16 %v638, %v637
        %v644 = vsel %vm493, %v630, 0
        %646 = vmatprep.subr.bf16.mxu0 0
        %647 = vmatpush1.bf16.msra.mxu0 %v639
        %648 = vmatprep.subr.bf16.mxu0 0
        %649 = vmatpush1.bf16.msra.mxu0 %v640
        %650 = vmatprep.subr.bf16.mxu0 0
        %651 = vmatpush1.bf16.msra.mxu0 0
        %652 = vmatprep.subr.bf16.mxu0 0
        %653 = vmatpush1.bf16.msra.mxu0 0
        %654 = vmatprep.subr.bf16.mxu0 0
        %655 = vmatpush1.bf16.msra.mxu0 0
        %656 = vmatprep.subr.bf16.mxu0 0
        %657 = vmatpush1.bf16.msra.mxu0 0
        %658 = vmatprep.subr.bf16.mxu0 0
        %659 = vmatpush1.bf16.msra.mxu0 0
        %660 = vmatprep.subr.bf16.mxu0 0
        %661 = vmatpush1.bf16.msra.mxu0 0
        %662 = vmatprep.subr.bf16.mxu0 0
        %663 = vmatpush1.bf16.msra.mxu0 0
        %664 = vmatprep.subr.bf16.mxu0 0
        %665 = vmatpush1.bf16.msra.mxu0 0
        %666 = vmatprep.subr.bf16.mxu0 0
        %667 = vmatpush1.bf16.msra.mxu0 0
        %668 = vmatprep.subr.bf16.mxu0 0
        %669 = vmatpush1.bf16.msra.mxu0 0
        %670 = vmatprep.subr.bf16.mxu0 0
        %671 = vmatpush1.bf16.msra.mxu0 0
        %672 = vmatprep.subr.bf16.mxu0 0
        %673 = vmatpush1.bf16.msra.mxu0 0
        %674 = vmatprep.subr.bf16.mxu0 0
        %675 = vmatpush1.bf16.msra.mxu0 0
        %676 = vmatprep.subr.bf16.mxu0 0
        %677 = vmatpush1.bf16.msra.mxu0 0
        %678 = vmatprep.mubr.bf16.mxu0 0
        %679 = vmatmul.mubr.bf16.gmra.mrb[0].mxu0 %v644
        %v680 = vpop.f32.mrb[0].mxu0
        %v681 = vadd.f32 0.0, %v680
        %v682 = vpop.f32.mrb[0].mxu0
        %v683 = vpop.f32.mrb[0].mxu0
        %v684 = vpop.f32.mrb[0].mxu0
        %685 = vdwg.mxu0
        %v686 = vrot.slane %v681, 4
        %v687 = vadd.f32 %v681, %v686
        %v688 = vrot.slane %v687, 2
        %v689 = vadd.f32 %v687, %v688
        %v690 = vrot.slane %v689, 1
        %v691 = vadd.f32 %v689, %v690
        %v692 = vmul.f32 %v681, %v681
        %v693 = vrot.slane %v692, 4
        %v694 = vadd.f32 %v692, %v693
        %v695 = vrot.slane %v694, 2
        %v696 = vadd.f32 %v694, %v695
        %v697 = vrot.slane %v696, 1
        %v698 = vadd.f32 %v696, %v697
        %v699 = vmul.f32 %v691, 0.125
        %v700 = vmul.f32 %v698, 0.125
        %v701 = vmul.f32 %v699, %v699
        %v702 = vsub.f32 %v700, %v701
        %v703 = vmax.f32 %v702, 0.0
        %v704 = vadd.f32 %v703, 1e-05
        %v705 = vrsqrt.pop %v704
        %v706 = vld [vmem:[#allocation7 + $0x8] sm:$0x1]
        %v707 = vmul.f32 %v705, %v706
        %v708 = vld [vmem:[#allocation7 + $0x9] sm:$0x1]
        %v709 = vmul.f32 %v699, %v707
        %v710 = vsub.f32 %v708, %v709
        %v711 = vlaneseq
        %v712 = vshrl.u32 %v711, 7
        %v713 = vsub.s32 0, %v712
        %v714 = vrot.slane %v707, %v713
        %v715 = vmul.f32 %v681, %v714
        %v716 = vlaneseq
        %v717 = vshrl.u32 %v716, 7
        %v718 = vsub.s32 0, %v717
        %v719 = vrot.slane %v710, %v718
        %v720 = vadd.f32 %v715, %v719
        %v721 = vmax.f32 %v720, 0.0
        %v722 = vld [vmem:[#allocation5 + $0x88] sm:$0xf]
        %v723 = vld [vmem:[#allocation5 + $0x8c] sm:$0xf]
        %v724 = vld [vmem:[#allocation5 + $0x90] sm:$0xf]
        %v725 = vld [vmem:[#allocation5 + $0x94] sm:$0xf]
        %v726 = vld [vmem:[#allocation5 + $0x98] sm:$0xf]
        %v727 = vld [vmem:[#allocation5 + $0x9c] sm:$0xf]
        %v728 = vld [vmem:[#allocation5 + $0xa0] sm:$0xf]
        %v729 = vld [vmem:[#allocation5 + $0xa4] sm:$0xf]
        %v730 = vpack.c.bf16 %v721, %v721
        %v731 = vld [vmem:[#allocation7 + $0x1] sm:$0x1]
        %v732 = vlaneseq
        %v733 = vshrl.u32 %v732, 7
        %v734 = vsub.s32 0, %v733
        %v735 = vrot.slane %v731, %v734
        %v744 = vunpack.c.l.b16 %v722
        %v745 = vunpack.c.l.b16 %v723
        %v746 = vunpack.c.l.b16 %v724
        %v747 = vunpack.c.l.b16 %v725
        %v748 = vunpack.c.l.b16 %v726
        %v749 = vunpack.c.l.b16 %v727
        %v750 = vunpack.c.l.b16 %v728
        %v751 = vunpack.c.l.b16 %v729
        %v752 = vpack.c.b16 %v745, %v744
        %v753 = vpack.c.b16 %v747, %v746
        %v754 = vpack.c.b16 %v749, %v748
        %v755 = vpack.c.b16 %v751, %v750
        %v761 = vsel %vm391, %v730, 0
        %763 = vmatprep.subr.bf16.mxu0 0
        %764 = vmatpush1.bf16.msra.mxu0 %v752
        %765 = vmatprep.subr.bf16.mxu0 0
        %766 = vmatpush1.bf16.msra.mxu0 %v753
        %767 = vmatprep.subr.bf16.mxu0 0
        %768 = vmatpush1.bf16.msra.mxu0 %v754
        %769 = vmatprep.subr.bf16.mxu0 0
        %770 = vmatpush1.bf16.msra.mxu0 %v755
        %771 = vmatprep.subr.bf16.mxu0 0
        %772 = vmatpush1.bf16.msra.mxu0 0
        %773 = vmatprep.subr.bf16.mxu0 0
        %774 = vmatpush1.bf16.msra.mxu0 0
        %775 = vmatprep.subr.bf16.mxu0 0
        %776 = vmatpush1.bf16.msra.mxu0 0
        %777 = vmatprep.subr.bf16.mxu0 0
        %778 = vmatpush1.bf16.msra.mxu0 0
        %779 = vmatprep.subr.bf16.mxu0 0
        %780 = vmatpush1.bf16.msra.mxu0 0
        %781 = vmatprep.subr.bf16.mxu0 0
        %782 = vmatpush1.bf16.msra.mxu0 0
        %783 = vmatprep.subr.bf16.mxu0 0
        %784 = vmatpush1.bf16.msra.mxu0 0
        %785 = vmatprep.subr.bf16.mxu0 0
        %786 = vmatpush1.bf16.msra.mxu0 0
        %787 = vmatprep.subr.bf16.mxu0 0
        %788 = vmatpush1.bf16.msra.mxu0 0
        %789 = vmatprep.subr.bf16.mxu0 0
        %790 = vmatpush1.bf16.msra.mxu0 0
        %791 = vmatprep.subr.bf16.mxu0 0
        %792 = vmatpush1.bf16.msra.mxu0 0
        %793 = vmatprep.subr.bf16.mxu0 0
        %794 = vmatpush1.bf16.msra.mxu0 0
        %795 = vmatprep.mubr.bf16.mxu0 0
        %796 = vmatmul.mubr.bf16.gmra.mrb[0].mxu0 %v761
        %v797 = vpop.f32.mrb[0].mxu0
        %v798 = vadd.f32 %v735, %v797
        %v799 = vpop.f32.mrb[0].mxu0
        %v800 = vpop.f32.mrb[0].mxu0
        %v801 = vpop.f32.mrb[0].mxu0
        %802 = vdwg.mxu0
        %803 = vst [vmem:[%s214] sm:$0xff] %v798
        %s804 = sand.u32 %s97, 1
        %s805 = scalar_lea.sflag [#allocation4], %s804
        %s806 = sand.u32 %s97, 1
        %s807 = smul.addr %s806, 8
        %s808 = scalar_lea.vmem [#allocation8], %s807
        // Predicated region
        $region45: #{tpu_custom_call.1} parent=31 // pred_check
          %p809 = pneg %p107
        $region46: #{tpu_custom_call.1} parent=31 // pred_check_branch
          %811 = sbr.rel (%p809) target = $region48
        $region47: #{tpu_custom_call.1} parent=31 // pred_region
          %s813 = ssub.s32 128, 128
          %814 = vsyncadd %s805, %s813
          %s815 = smul.addr %s21, 128
          %s816 = scalar_lea.hbm %s3, %s815
          %s818 = sshll.u32 %s808, 4
          %s819 = int_to_ptr.vmem [resolvable:$true] %s818
          %821 = dma.vmem_to_hbm [thread:$0]  %s819, 128, %s816, %s805
        $region48: #{tpu_custom_call.1} parent=31 // pred_fallthru
          _
      $region32: #{tpu_custom_call.1} parent=5 // pred_fallthru
        _
      %p822 = scmp.le.s32.totalorder 2, %s16
      // Predicated region
      $region49: #{tpu_custom_call.1} parent=5 // pred_check
        %p823 = pneg %p822
      $region50: #{tpu_custom_call.1} parent=5 // pred_check_branch
        %825 = sbr.rel (%p823) target = $region52
      $region51: #{tpu_custom_call.1} parent=5 // pred_region
        %s826 = ssub.s32 %s16, 2
        // Predicated region
        $region53: #{tpu_custom_call.1} parent=51 // pred_check
          %p827 = pneg %p113
        $region54: #{tpu_custom_call.1} parent=51 // pred_check_branch
          %829 = sbr.rel (%p827) target = $region56
        $region55: #{tpu_custom_call.1} parent=51 // pred_region
          %s830 = sand.u32 %s98, 1
          %s831 = scalar_lea.sflag [#allocation4], %s830
          %s832 = sand.u32 %s98, 1
          %s833 = smul.addr %s832, 8
          %s834 = scalar_lea.vmem [#allocation8], %s833
          %835 = dma.done %s831, 128
        $region56: #{tpu_custom_call.1} parent=51 // pred_fallthru
          _
      $region52: #{tpu_custom_call.1} parent=5 // pred_fallthru
        _
    $region6: #{tpu_custom_call.1} parent=1 // loop_footer
      %s20 = sadd.s32 1, %s16
    $region7: #{tpu_custom_call.1} parent=1 // loop_footer_branch
      %15 = sbr.rel target = $region3
    $region8: #{tpu_custom_call.1} parent=1 // loop_exit
      _
    %836 = vsyncpa [#allocation3], 1
    %s837 = scalar_lea.sflag [#allocation3], 1
    %838 = vsyncpa %s837, 1
    %839 = vsyncpa [#allocation6], 1
    %840 = vsyncpa [#allocation4], 1
    %s841 = scalar_lea.sflag [#allocation4], 1
    %842 = vsyncpa %s841, 1

</llo_original>
